<compile_context>
chip_gen: v6e
topology: v6e:2x2x1
jax: 0.10.0
libtpu: 0.0.40
codegen_flags: <defaults>
</compile_context>

<pallas_src>
import functools

import jax
import jax.numpy as jnp
from jax import lax
from jax.experimental import pallas as pl
from jax.experimental.pallas import tpu as pltpu
import numpy as np


# ----------------------------- generation-aware VMEM budget -----------------------------
def _vmem_budget_bytes():
    """Scoped-VMEM budget: half of physical, capped at 64 MiB.
    v5e/v6e (128 MiB physical) -> 64 MiB;  v7x (64 MiB physical) -> 32 MiB."""
    phys = 64 << 20  # conservative default if the query is unavailable (v7x physical)
    try:
        info = pltpu.get_tpu_info()
        phys = int(getattr(info, "vmem_capacity_bytes", phys))
    except Exception:
        pass
    return int(min(max(phys // 2, 16 << 20), 64 << 20))


# ----------------------------------- shared compute helpers -----------------------------------
def _block_sum_max(x):
    """Per-channel sum and max (both f32) over the lane (flattened-spatial) axis of x: (C, S)."""
    if x.dtype == jnp.float32:
        s = jnp.sum(x, axis=1, keepdims=True)                               # exact f32 reduce
    else:
        # bf16/fp8: MXU ones-matmul accumulates in f32 without upcasting the whole block.
        ones = jnp.ones((x.shape[1], 1), dtype=x.dtype)
        s = jnp.dot(x, ones, preferred_element_type=jnp.float32)
    m = jnp.max(x, axis=1, keepdims=True).astype(jnp.float32)               # max is exact
    return s.astype(jnp.float32), m


def _mlp_sigmoid(avg, mx, w1, b1, w2, b2):
    """sigmoid(mlp(avg) + mlp(max)) with the shared MLP run once on a stacked (C, 2) RHS."""
    C = avg.shape[0]
    col = lax.broadcasted_iota(jnp.int32, (C, 2), 1)
    pooled = jnp.where(col == 0, avg, mx)                                   # (C, 2) = [avg | max]
    h = jnp.dot(w1, pooled, preferred_element_type=jnp.float32) + b1        # (hidden, 2)
    h = jnp.maximum(h, 0.0)                                                 # ReLU per column
    o = jnp.dot(w2, h, preferred_element_type=jnp.float32) + b2             # (C, 2)
    logits = jnp.sum(o, axis=1, keepdims=True)                              # = mlp(avg) + mlp(max)
    return jax.nn.sigmoid(logits)                                           # (C, 1) f32


# ------------------- Fused kernel: pool + MLP + sigmoid + broadcast multiply -------------------
def _fused_kernel(x_ref, w1_ref, b1_ref, w2_ref, b2_ref, o_ref):
    # x_ref : VMEM (1, C, HW)   one batch element, spatial flattened into lanes
    # o_ref : VMEM (1, C, HW)   x * sigmoid(mlp(avg) + mlp(max)) for this batch element
    x = x_ref[0]                                                            # (C, HW) native dtype
    s, m = _block_sum_max(x)
    avg = s * (1.0 / x.shape[1])
    scale = _mlp_sigmoid(avg, m, w1_ref[...], b1_ref[...], w2_ref[...], b2_ref[...])  # (C,1) f32
    if x.dtype == jnp.float32:
        o_ref[0] = x * scale
    else:
        # keep the streaming multiply in the input dtype (bf16 VALU on v6e/v7x, no f32 upcast)
        o_ref[0] = x * scale.astype(x.dtype)


# ---------------- Fallback kernel 1: spatially-chunked pool + MLP + sigmoid ----------------
def _pool_mlp_kernel(x_ref, w1_ref, b1_ref, w2_ref, b2_ref, scale_ref, sum_sc, max_sc, *, inv_hw):
    s_idx = pl.program_id(1)

    @pl.when(s_idx == 0)
    def _():
        sum_sc[...] = jnp.zeros_like(sum_sc)
        max_sc[...] = jnp.full_like(max_sc, -jnp.inf)

    s, m = _block_sum_max(x_ref[0])                                         # this spatial chunk
    sum_sc[...] += s
    max_sc[...] = jnp.maximum(max_sc[...], m)

    @pl.when(s_idx == pl.num_programs(1) - 1)
    def _():
        avg = sum_sc[...] * inv_hw
        scale_ref[0] = _mlp_sigmoid(avg, max_sc[...], w1_ref[...], b1_ref[...],
                                    w2_ref[...], b2_ref[...])


# ---------------- Fallback kernel 2: tiled, lane-dense broadcast multiply ----------------
def _scale_mul_kernel(x_ref, s_ref, o_ref):
    x = x_ref[...]
    s = s_ref[...]
    if x.dtype == jnp.float32:
        o_ref[...] = x * s
    else:
        o_ref[...] = x * s.astype(x.dtype)


# --------------------------------------- tile selection ---------------------------------------
def _choose_channel_tile(C, HW, itemsize, target_bytes):
    """Largest divisor of C (multiple of the dtype's sublane step) with (TC, HW) under budget."""
    step = 8 * max(1, 4 // itemsize)          # f32: 8, bf16: 16, int8/fp8: 32 sublanes
    if C % step != 0:
        return C
    cap = max(step, target_bytes // max(1, HW * itemsize))
    best = step
    for d in range(step, C + 1, step):
        if C % d == 0 and d <= cap:
            best = d
    return best


def _choose_spatial_tile(rows, HW, itemsize, target_bytes):
    """Largest multiple-of-128 divisor of HW with (rows, TS) under budget; HW itself if it fits."""
    if rows * HW * itemsize <= target_bytes:
        return HW
    if HW % 128 != 0:
        # TODO(synk): pad HW to a multiple of 128 on the wrapper side for non-power-of-two
        #             spatial sizes; for now keep the whole spatial extent resident (lane-dense).
        return HW
    cap = max(128, target_bytes // max(1, rows * itemsize))
    best = 128
    for d in range(128, HW + 1, 128):
        if HW % d == 0 and d <= cap:
            best = d
    return best


# ------------------------------------------ wrapper ------------------------------------------
def channel_attention(x, w1, b1, w2, b2):
    """x: (N, C, H, W); w1: (hidden, C); b1: (hidden,); w2: (C, hidden); b2: (C,)."""
    N, C, H, W = x.shape
    HW = H * W
    hidden = w1.shape[0]
    itemsize = x.dtype.itemsize
    x3 = x.reshape(N, C, HW)

    budget = _vmem_budget_bytes()
    w1f = w1.astype(jnp.float32)
    b1f = b1.reshape(hidden, 1).astype(jnp.float32)
    w2f = w2.astype(jnp.float32)
    b2f = b2.reshape(C, 1).astype(jnp.float32)

    block_bytes = C * HW * itemsize
    # Fused path needs ~2 in-buffers + 2 out-buffers of the per-batch block plus intermediates.
    if 6 * block_bytes <= budget:
        # Single pass over x: 1 HBM read + 1 HBM write.  Grid is batch-only ("parallel");
        # with N >= 2 the two v7x TensorCores each take a share of the batch.
        out3 = pl.pallas_call(
            _fused_kernel,
            out_shape=jax.ShapeDtypeStruct((N, C, HW), x.dtype),
            grid_spec=pltpu.PrefetchScalarGridSpec(
                num_scalar_prefetch=0,
                grid=(N,),
                in_specs=[
                    pl.BlockSpec((1, C, HW), lambda b: (b, 0, 0)),   # x, one batch element
                    pl.BlockSpec((hidden, C), lambda b: (0, 0)),     # W1 (resident)
                    pl.BlockSpec((hidden, 1), lambda b: (0, 0)),     # b1
                    pl.BlockSpec((C, hidden), lambda b: (0, 0)),     # W2
                    pl.BlockSpec((C, 1), lambda b: (0, 0)),          # b2
                ],
                out_specs=pl.BlockSpec((1, C, HW), lambda b: (b, 0, 0)),
            ),
            compiler_params=pltpu.CompilerParams(
                dimension_semantics=("parallel",),
                vmem_limit_bytes=budget),
        )(x3, w1f, b1f, w2f, b2f)
        return out3.reshape(N, C, H, W)

    # ------------- fallback: per-batch block too large for VMEM -------------
    target = budget // 8

    # (a) spatially-chunked pooling + MLP + sigmoid -> scale (N, C, 1)
    TS = _choose_spatial_tile(C, HW, itemsize, target)
    scale = pl.pallas_call(
        functools.partial(_pool_mlp_kernel, inv_hw=1.0 / HW),
        out_shape=jax.ShapeDtypeStruct((N, C, 1), jnp.float32),
        grid_spec=pltpu.PrefetchScalarGridSpec(
            num_scalar_prefetch=0,
            grid=(N, HW // TS),
            in_specs=[
                pl.BlockSpec((1, C, TS), lambda b, s: (b, 0, s)),
                pl.BlockSpec((hidden, C), lambda b, s: (0, 0)),
                pl.BlockSpec((hidden, 1), lambda b, s: (0, 0)),
                pl.BlockSpec((C, hidden), lambda b, s: (0, 0)),
                pl.BlockSpec((C, 1), lambda b, s: (0, 0)),
            ],
            out_specs=pl.BlockSpec((1, C, 1), lambda b, s: (b, 0, 0)),
            scratch_shapes=[pltpu.VMEM((C, 1), jnp.float32),     # running sum
                            pltpu.VMEM((C, 1), jnp.float32)],    # running max
        ),
        compiler_params=pltpu.CompilerParams(
            dimension_semantics=("parallel", "arbitrary"),
            vmem_limit_bytes=budget),
    )(x3, w1f, b1f, w2f, b2f)

    # (b) lane-dense channel/spatial-tiled broadcast multiply
    TC = _choose_channel_tile(C, HW, itemsize, target)
    TSm = _choose_spatial_tile(TC, HW, itemsize, target)
    out3 = pl.pallas_call(
        _scale_mul_kernel,
        out_shape=jax.ShapeDtypeStruct((N, C, HW), x.dtype),
        grid_spec=pltpu.PrefetchScalarGridSpec(
            num_scalar_prefetch=0,
            grid=(N, C // TC, HW // TSm),
            in_specs=[
                pl.BlockSpec((1, TC, TSm), lambda b, c, s: (b, c, s)),
                pl.BlockSpec((1, TC, 1), lambda b, c, s: (b, c, 0)),
            ],
            out_specs=pl.BlockSpec((1, TC, TSm), lambda b, c, s: (b, c, s)),
        ),
        compiler_params=pltpu.CompilerParams(
            dimension_semantics=("parallel", "parallel", "parallel"),
            vmem_limit_bytes=budget),
    )(x3, scale)
    return out3.reshape(N, C, H, W)


# ------------------------------------ pure-JAX reference --------------------------------------
def channel_attention_ref(x, w1, b1, w2, b2):
    avg = jnp.mean(x, axis=(2, 3))                         # (N, C)  AvgPool2d((H,W)) + Flatten
    mx = jnp.max(x, axis=(2, 3))                           # (N, C)  MaxPool2d((H,W)) + Flatten

    def mlp(p):
        h = jnp.dot(p, w1.T, precision=lax.Precision.HIGHEST) + b1
        h = jnp.maximum(h, 0.0)
        return jnp.dot(h, w2.T, precision=lax.Precision.HIGHEST) + b2

    logits = mlp(avg) + mlp(mx)                            # stack(...).sum(dim=0)
    scale = jax.nn.sigmoid(logits)[:, :, None, None]
    return x * scale


if __name__ == "__main__":
    key = jax.random.PRNGKey(0)
    k_x, k_w1, k_b1, k_w2, k_b2 = jax.random.split(key, 5)

    N, C, H, W = 2, 128, 16, 16
    reduction_ratio = 16
    hidden = C // reduction_ratio                          # 8

    x = jax.random.normal(k_x, (N, C, H, W), dtype=jnp.float32)
    w1 = jax.random.normal(k_w1, (hidden, C), dtype=jnp.float32) * 0.1
    b1 = jax.random.normal(k_b1, (hidden,), dtype=jnp.float32) * 0.1
    w2 = jax.random.normal(k_w2, (C, hidden), dtype=jnp.float32) * 0.1
    b2 = jax.random.normal(k_b2, (C,), dtype=jnp.float32) * 0.1

    out = jax.block_until_ready(channel_attention(x, w1, b1, w2, b2))
    ref = jax.block_until_ready(channel_attention_ref(x, w1, b1, w2, b2))
    np.testing.assert_allclose(np.asarray(out), np.asarray(ref), rtol=1e-4, atol=1e-4)

    print("KERNEL_OK")
</pallas_src>

<mosaic_0001>
module attributes {stable_mosaic.version = 11 : i64} {
  func.func @_fused_kernel(%arg0: i32, %arg1: memref<1x128x256xf32, #tpu.memory_space<vmem>>, %arg2: memref<8x128xf32, #tpu.memory_space<vmem>>, %arg3: memref<8x1xf32, #tpu.memory_space<vmem>>, %arg4: memref<128x8xf32, #tpu.memory_space<vmem>>, %arg5: memref<128x1xf32, #tpu.memory_space<vmem>>, %arg6: memref<1x128x256xf32, #tpu.memory_space<vmem>>) attributes {dimension_semantics = [#tpu.dimension_semantics<parallel>], iteration_bounds = array<i64: 2>, scalar_prefetch = 0 : i64, scratch_operands = 0 : i64, tpu.core_type = #tpu.core_type<tc>, window_params = [{transform_indices = @transform_0, window_bounds = array<i64: 1, 128, 256>}, {pipeline_mode = #tpu.pipeline_mode<synchronous>, transform_indices = @transform_1, window_bounds = array<i64: 8, 128>}, {pipeline_mode = #tpu.pipeline_mode<synchronous>, transform_indices = @transform_2, window_bounds = array<i64: 8, 1>}, {pipeline_mode = #tpu.pipeline_mode<synchronous>, transform_indices = @transform_3, window_bounds = array<i64: 128, 8>}, {pipeline_mode = #tpu.pipeline_mode<synchronous>, transform_indices = @transform_4, window_bounds = array<i64: 128, 1>}, {transform_indices = @transform_5, window_bounds = array<i64: 1, 128, 256>}]} {
    %c0 = arith.constant 0 : index
    %c0_0 = arith.constant 0 : index
    %c0_1 = arith.constant 0 : index
    %0 = vector.load %arg1[%c0, %c0_0, %c0_1] : memref<1x128x256xf32, #tpu.memory_space<vmem>>, vector<1x128x256xf32>
    %1 = vector.shape_cast %0 : vector<1x128x256xf32> to vector<128x256xf32>
    %cst = arith.constant dense<0.000000e+00> : vector<128xf32>
    %2 = vector.multi_reduction <add>, %1, %cst [1] : vector<128x256xf32> to vector<128xf32>
    %3 = vector.shape_cast %2 : vector<128xf32> to vector<128x1xf32>
    %cst_2 = arith.constant dense<0xFF800000> : vector<128xf32>
    %4 = vector.multi_reduction <maximumf>, %1, %cst_2 [1] : vector<128x256xf32> to vector<128xf32>
    %5 = vector.shape_cast %4 : vector<128xf32> to vector<128x1xf32>
    %cst_3 = arith.constant 3.906250e-03 : f32
    %6 = vector.broadcast %cst_3 : f32 to vector<128x1xf32>
    %7 = arith.mulf %3, %6 : vector<128x1xf32>
    %c0_4 = arith.constant 0 : index
    %c0_5 = arith.constant 0 : index
    %8 = vector.load %arg2[%c0_4, %c0_5] : memref<8x128xf32, #tpu.memory_space<vmem>>, vector<8x128xf32>
    %c0_6 = arith.constant 0 : index
    %c0_7 = arith.constant 0 : index
    %9 = vector.load %arg3[%c0_6, %c0_7] : memref<8x1xf32, #tpu.memory_space<vmem>>, vector<8x1xf32>
    %c0_8 = arith.constant 0 : index
    %c0_9 = arith.constant 0 : index
    %10 = vector.load %arg4[%c0_8, %c0_9] : memref<128x8xf32, #tpu.memory_space<vmem>>, vector<128x8xf32>
    %c0_10 = arith.constant 0 : index
    %c0_11 = arith.constant 0 : index
    %11 = vector.load %arg5[%c0_10, %c0_11] : memref<128x1xf32, #tpu.memory_space<vmem>>, vector<128x1xf32>
    %12 = tpu.iota {dimensions = array<i32: 1>} : vector<128x2xi32>
    %c0_i32 = arith.constant 0 : i32
    %13 = vector.broadcast %c0_i32 : i32 to vector<128x2xi32>
    %14 = arith.cmpi eq, %12, %13 : vector<128x2xi32>
    %15 = vector.shape_cast %7 : vector<128x1xf32> to vector<128x1xf32>
    %16 = vector.broadcast %15 : vector<128x1xf32> to vector<128x2xf32>
    %17 = vector.shape_cast %5 : vector<128x1xf32> to vector<128x1xf32>
    %18 = vector.broadcast %17 : vector<128x1xf32> to vector<128x2xf32>
    %19 = arith.select %14, %16, %18 : vector<128x2xi1>, vector<128x2xf32>
    %cst_12 = arith.constant dense<0.000000e+00> : vector<8x2xf32>
    %20 = tpu.matmul %8, %19, %cst_12 {dimension_numbers = #tpu.dot_dimension_numbers<[1], [0], [0], [1], [0, 0, 1, 1], [], []>} : vector<8x128xf32>, vector<128x2xf32>, vector<8x2xf32> -> vector<8x2xf32>
    %21 = vector.broadcast %9 : vector<8x1xf32> to vector<8x2xf32>
    %22 = arith.addf %20, %21 : vector<8x2xf32>
    %cst_13 = arith.constant 0.000000e+00 : f32
    %23 = vector.broadcast %cst_13 : f32 to vector<8x2xf32>
    %24 = arith.maximumf %22, %23 : vector<8x2xf32>
    %cst_14 = arith.constant dense<0.000000e+00> : vector<128x2xf32>
    %25 = tpu.matmul %10, %24, %cst_14 {dimension_numbers = #tpu.dot_dimension_numbers<[1], [0], [0], [1], [0, 0, 1, 1], [], []>} : vector<128x8xf32>, vector<8x2xf32>, vector<128x2xf32> -> vector<128x2xf32>
    %26 = vector.broadcast %11 : vector<128x1xf32> to vector<128x2xf32>
    %27 = arith.addf %25, %26 : vector<128x2xf32>
    %cst_15 = arith.constant dense<0.000000e+00> : vector<128xf32>
    %28 = vector.multi_reduction <add>, %27, %cst_15 [1] : vector<128x2xf32> to vector<128xf32>
    %29 = vector.shape_cast %28 : vector<128xf32> to vector<128x1xf32>
    %30 = arith.negf %29 : vector<128x1xf32>
    %31 = math.exp %30 : vector<128x1xf32>
    %cst_16 = arith.constant 1.000000e+00 : f32
    %32 = vector.broadcast %cst_16 : f32 to vector<128x1xf32>
    %33 = arith.addf %32, %31 : vector<128x1xf32>
    %34 = arith.divf %32, %33 : vector<128x1xf32>
    %35 = vector.broadcast %34 : vector<128x1xf32> to vector<128x256xf32>
    %36 = arith.mulf %1, %35 : vector<128x256xf32>
    %c0_17 = arith.constant 0 : index
    %c0_18 = arith.constant 0 : index
    %c0_19 = arith.constant 0 : index
    %37 = vector.load %arg6[%c0_17, %c0_18, %c0_19] : memref<1x128x256xf32, #tpu.memory_space<vmem>>, vector<1x128x256xf32>
    %38 = vector.shape_cast %37 : vector<1x128x256xf32> to vector<128x256xf32>
    %39 = vector.shape_cast %36 : vector<128x256xf32> to vector<1x128x256xf32>
    tpu.vector_store %arg6[%c0_17, %c0_18, %c0_19], %39 {strides = array<i32>} : memref<1x128x256xf32, #tpu.memory_space<vmem>>, vector<1x128x256xf32>,
    return
  }
  func.func @transform_0(%arg0: i32) -> (i32, i32, i32) {
    %c0_i32 = arith.constant 0 : i32
    %c0_i32_0 = arith.constant 0 : i32
    %c0_i32_1 = arith.constant 0 : i32
    return %arg0, %c0_i32, %c0_i32_0 : i32, i32, i32
  }
  func.func @transform_1(%arg0: i32) -> (i32, i32) {
    %c0_i32 = arith.constant 0 : i32
    %c0_i32_0 = arith.constant 0 : i32
    %c0_i32_1 = arith.constant 0 : i32
    return %c0_i32, %c0_i32_0 : i32, i32
  }
  func.func @transform_2(%arg0: i32) -> (i32, i32) {
    %c0_i32 = arith.constant 0 : i32
    %c0_i32_0 = arith.constant 0 : i32
    %c0_i32_1 = arith.constant 0 : i32
    return %c0_i32, %c0_i32_0 : i32, i32
  }
  func.func @transform_3(%arg0: i32) -> (i32, i32) {
    %c0_i32 = arith.constant 0 : i32
    %c0_i32_0 = arith.constant 0 : i32
    %c0_i32_1 = arith.constant 0 : i32
    return %c0_i32, %c0_i32_0 : i32, i32
  }
  func.func @transform_4(%arg0: i32) -> (i32, i32) {
    %c0_i32 = arith.constant 0 : i32
    %c0_i32_0 = arith.constant 0 : i32
    %c0_i32_1 = arith.constant 0 : i32
    return %c0_i32, %c0_i32_0 : i32, i32
  }
  func.func @transform_5(%arg0: i32) -> (i32, i32, i32) {
    %c0_i32 = arith.constant 0 : i32
    %c0_i32_0 = arith.constant 0 : i32
    %c0_i32_1 = arith.constant 0 : i32
    return %arg0, %c0_i32, %c0_i32_0 : i32, i32, i32
  }
}

</mosaic_0001>

<llo_original>
// kernel: tpu_custom_call.1
$region0: #{tpu_custom_call.1}
  #allocation0 [shape = 'u32[]', space=smem, size = 0x4, offset = 0x4, fixed_abs, tag = 'smem constant byte address 0x4 - core index']
  #allocation1 [shape = 'u32[144,128]{1,0:T(1,128)}', space=vmem, size = 0x12000, scoped, tag = 'internal scratch']
  %s0 = inlined_call_operand.hbm [shape: f32[2,128,256], index: 0, kind: input, shape index: {}]
  %s1 = inlined_call_operand.vmem [shape: f32[8,128], index: 1, kind: input, shape index: {}]
  %s2 = inlined_call_operand.vmem [shape: f32[8,1], index: 2, kind: input, shape index: {}]
  %s3 = inlined_call_operand.vmem [shape: f32[128,8], index: 3, kind: input, shape index: {}]
  %s4 = inlined_call_operand.vmem [shape: f32[128,1], index: 4, kind: input, shape index: {}]
  %s5 = inlined_call_operand.hbm [shape: f32[2,128,256], index: 5, kind: output, shape index: {}]
  %s6 = sld [smem:[#allocation0]]
  $region57: #{tpu_custom_call.1} parent=0
    _
  %s8 = ssub.s32 1, %s6
  %s9 = scalar_select 0, %s8, %s6
  $region1: #{tpu_custom_call.1} parent=0
    #allocation2 [shape = 'u8[262144]{0}', space=vmem, size = 0x40000, scoped, tag = 'input window, operand 0']
    #allocation3 [shape = 's32[2]{0}', space=sflag, size = 0x8, scoped, tag = 'scoped memory for tpu_custom_call.1']
    #allocation4 [shape = 's32[2]{0}', space=sflag, size = 0x8, scoped, tag = 'scoped memory for tpu_custom_call.1']
    #allocation5 [shape = 'u8[262144]{0}', space=vmem, size = 0x40000, scoped, tag = 'output window, operand 0']
    %10 = vsyncpa [#allocation3], 0
    %s11 = scalar_lea.sflag [#allocation3], 1
    %12 = vsyncpa %s11, 0
    %13 = vsyncpa [#allocation4], 0
    %s14 = scalar_lea.sflag [#allocation4], 1
    %15 = vsyncpa %s14, 0
    loop: start=0, step=1, limit=4
    $region2: #{tpu_custom_call.1} parent=1 // loop_pre_header
      _
    $region3: #{tpu_custom_call.1} parent=1 // loop_header
      %s17 = sphi 0, %s21
      %p18 = scmp.ge.s32.totalorder %s17, 4
      %s27 = sphi 0, %s29
      %s30 = sphi 0, %s27
      %s31 = sphi 0, %s30
      %s47 = sphi 0, %s31
      %s51 = sphi 0, %s51
      %s53 = sphi 0, %s51
      %s54 = sphi 0, %s53
      %s68 = sphi 0, %s54
      %s72 = sphi 0, %s72
      %s74 = sphi 0, %s72
      %s75 = sphi 0, %s74
      %s89 = sphi 0, %s75
      %s93 = sphi 0, %s93
      %s95 = sphi 0, %s93
      %s96 = sphi 0, %s95
      %s110 = sphi 0, %s96
      %s114 = sphi 0, %s114
      %s116 = sphi 0, %s114
      %s117 = sphi 0, %s116
      %s131 = sphi 0, %s117
      %s137 = sphi 0, %s139
      %s140 = sphi 0, %s137
      %s141 = sphi 0, %s140
      %s157 = sphi 0, %s141
    $region4: #{tpu_custom_call.1} parent=1 // loop_header_branch
      %20 = sbr.rel (%p18) target = $region8
    $region5: #{tpu_custom_call.1} parent=1 // loop_body
      %s22 = ssub.s32 %s17, 1
      %s23 = ssub.s32 %s17, 2
      %s24 = sadd.s32 %s17, 1
      %s25 = ssub.s32 %s17, %s24
      %p26 = scmp.eq.s32.totalorder %s25, 0
      %s28 = sadd.s32 %s27, 1
      %s29 = scalar_select %p26, %s27, %s28
      %p32 = pneg %p26
      %p33 = scmp.eq.s32.totalorder %s17, 1
      %p34 = por %p32, %p33
      %p35 = scmp.ne.s32.totalorder %s27, %s30
      %p36 = scmp.eq.s32.totalorder %s17, 0
      %p37 = por %p35, %p36
      %p38 = scmp.ne.s32.totalorder %s27, %s30
      %p39 = scmp.eq.s32.totalorder %s22, 1
      %p40 = por %p38, %p39
      %p41 = scmp.ne.s32.totalorder %s30, %s31
      %p42 = scmp.eq.s32.totalorder %s22, 0
      %p43 = por %p41, %p42
      %p44 = scmp.ne.s32.totalorder %s30, %s31
      %p45 = scmp.eq.s32.totalorder %s23, 1
      %p46 = por %p44, %p45
      %p48 = scmp.ne.s32.totalorder %s31, %s47
      %p49 = scmp.eq.s32.totalorder %s23, 0
      %p50 = por %p48, %p49
      %s52 = sadd.s32 %s51, 1
      %p55 = scmp.eq.s32.totalorder %s17, 1
      %p56 = scmp.ne.s32.totalorder %s51, %s53
      %p57 = scmp.eq.s32.totalorder %s17, 0
      %p58 = por %p56, %p57
      %p59 = scmp.ne.s32.totalorder %s51, %s53
      %p60 = scmp.eq.s32.totalorder %s22, 1
      %p61 = por %p59, %p60
      %p62 = scmp.ne.s32.totalorder %s53, %s54
      %p63 = scmp.eq.s32.totalorder %s22, 0
      %p64 = por %p62, %p63
      %p65 = scmp.ne.s32.totalorder %s53, %s54
      %p66 = scmp.eq.s32.totalorder %s23, 1
      %p67 = por %p65, %p66
      %p69 = scmp.ne.s32.totalorder %s54, %s68
      %p70 = scmp.eq.s32.totalorder %s23, 0
      %p71 = por %p69, %p70
      %s73 = sadd.s32 %s72, 1
      %p76 = scmp.eq.s32.totalorder %s17, 1
      %p77 = scmp.ne.s32.totalorder %s72, %s74
      %p78 = scmp.eq.s32.totalorder %s17, 0
      %p79 = por %p77, %p78
      %p80 = scmp.ne.s32.totalorder %s72, %s74
      %p81 = scmp.eq.s32.totalorder %s22, 1
      %p82 = por %p80, %p81
      %p83 = scmp.ne.s32.totalorder %s74, %s75
      %p84 = scmp.eq.s32.totalorder %s22, 0
      %p85 = por %p83, %p84
      %p86 = scmp.ne.s32.totalorder %s74, %s75
      %p87 = scmp.eq.s32.totalorder %s23, 1
      %p88 = por %p86, %p87
      %p90 = scmp.ne.s32.totalorder %s75, %s89
      %p91 = scmp.eq.s32.totalorder %s23, 0
      %p92 = por %p90, %p91
      %s94 = sadd.s32 %s93, 1
      %p97 = scmp.eq.s32.totalorder %s17, 1
      %p98 = scmp.ne.s32.totalorder %s93, %s95
      %p99 = scmp.eq.s32.totalorder %s17, 0
      %p100 = por %p98, %p99
      %p101 = scmp.ne.s32.totalorder %s93, %s95
      %p102 = scmp.eq.s32.totalorder %s22, 1
      %p103 = por %p101, %p102
      %p104 = scmp.ne.s32.totalorder %s95, %s96
      %p105 = scmp.eq.s32.totalorder %s22, 0
      %p106 = por %p104, %p105
      %p107 = scmp.ne.s32.totalorder %s95, %s96
      %p108 = scmp.eq.s32.totalorder %s23, 1
      %p109 = por %p107, %p108
      %p111 = scmp.ne.s32.totalorder %s96, %s110
      %p112 = scmp.eq.s32.totalorder %s23, 0
      %p113 = por %p111, %p112
      %s115 = sadd.s32 %s114, 1
      %p118 = scmp.eq.s32.totalorder %s17, 1
      %p119 = scmp.ne.s32.totalorder %s114, %s116
      %p120 = scmp.eq.s32.totalorder %s17, 0
      %p121 = por %p119, %p120
      %p122 = scmp.ne.s32.totalorder %s114, %s116
      %p123 = scmp.eq.s32.totalorder %s22, 1
      %p124 = por %p122, %p123
      %p125 = scmp.ne.s32.totalorder %s116, %s117
      %p126 = scmp.eq.s32.totalorder %s22, 0
      %p127 = por %p125, %p126
      %p128 = scmp.ne.s32.totalorder %s116, %s117
      %p129 = scmp.eq.s32.totalorder %s23, 1
      %p130 = por %p128, %p129
      %p132 = scmp.ne.s32.totalorder %s117, %s131
      %p133 = scmp.eq.s32.totalorder %s23, 0
      %p134 = por %p132, %p133
      %s135 = ssub.s32 %s17, %s24
      %p136 = scmp.eq.s32.totalorder %s135, 0
      %s138 = sadd.s32 %s137, 1
      %s139 = scalar_select %p136, %s137, %s138
      %p142 = pneg %p136
      %p143 = scmp.eq.s32.totalorder %s17, 1
      %p144 = por %p142, %p143
      %p145 = scmp.ne.s32.totalorder %s137, %s140
      %p146 = scmp.eq.s32.totalorder %s17, 0
      %p147 = por %p145, %p146
      %p148 = scmp.ne.s32.totalorder %s137, %s140
      %p149 = scmp.eq.s32.totalorder %s22, 1
      %p150 = por %p148, %p149
      %p151 = scmp.ne.s32.totalorder %s140, %s141
      %p152 = scmp.eq.s32.totalorder %s22, 0
      %p153 = por %p151, %p152
      %p154 = scmp.ne.s32.totalorder %s140, %s141
      %p155 = scmp.eq.s32.totalorder %s23, 1
      %p156 = por %p154, %p155
      %p158 = scmp.ne.s32.totalorder %s141, %s157
      %p159 = scmp.eq.s32.totalorder %s23, 0
      %p160 = por %p158, %p159
      %p161 = scmp.le.s32.totalorder 1, %s17
      %p162 = scmp.lt.s32.totalorder %s17, 3
      %p163 = pnand %p161, %p162
      %p164 = pneg %p163
      // Predicated region
      $region9: #{tpu_custom_call.1} parent=5 // pred_check
        _
      $region10: #{tpu_custom_call.1} parent=5 // pred_check_branch
        %166 = sbr.rel (%p163) target = $region12
      $region11: #{tpu_custom_call.1} parent=5 // pred_region
        %s167 = ssub.s32 %s17, 1
        // Predicated region
        $region13: #{tpu_custom_call.1} parent=11 // pred_check
          %p168 = pneg %p64
        $region14: #{tpu_custom_call.1} parent=11 // pred_check_branch
          %170 = sbr.rel (%p168) target = $region16
        $region15: #{tpu_custom_call.1} parent=11 // pred_region
          _
        $region16: #{tpu_custom_call.1} parent=11 // pred_fallthru
          _
        // Predicated region
        $region17: #{tpu_custom_call.1} parent=11 // pred_check
          %p171 = pneg %p85
        $region18: #{tpu_custom_call.1} parent=11 // pred_check_branch
          %173 = sbr.rel (%p171) target = $region20
        $region19: #{tpu_custom_call.1} parent=11 // pred_region
          _
        $region20: #{tpu_custom_call.1} parent=11 // pred_fallthru
          _
        // Predicated region
        $region21: #{tpu_custom_call.1} parent=11 // pred_check
          %p174 = pneg %p106
        $region22: #{tpu_custom_call.1} parent=11 // pred_check_branch
          %176 = sbr.rel (%p174) target = $region24
        $region23: #{tpu_custom_call.1} parent=11 // pred_region
          _
        $region24: #{tpu_custom_call.1} parent=11 // pred_fallthru
          _
        // Predicated region
        $region25: #{tpu_custom_call.1} parent=11 // pred_check
          %p177 = pneg %p127
        $region26: #{tpu_custom_call.1} parent=11 // pred_check_branch
          %179 = sbr.rel (%p177) target = $region28
        $region27: #{tpu_custom_call.1} parent=11 // pred_region
          _
        $region28: #{tpu_custom_call.1} parent=11 // pred_fallthru
          _
      $region12: #{tpu_custom_call.1} parent=5 // pred_fallthru
        _
      %p180 = scmp.lt.s32.totalorder %s17, 2
      // Predicated region
      $region29: #{tpu_custom_call.1} parent=5 // pred_check
        %p181 = pneg %p180
      $region30: #{tpu_custom_call.1} parent=5 // pred_check_branch
        %183 = sbr.rel (%p181) target = $region32
      $region31: #{tpu_custom_call.1} parent=5 // pred_region
        // Predicated region
        $region33: #{tpu_custom_call.1} parent=31 // pred_check
          %p184 = pneg %p37
        $region34: #{tpu_custom_call.1} parent=31 // pred_check_branch
          %186 = sbr.rel (%p184) target = $region36
        $region35: #{tpu_custom_call.1} parent=31 // pred_region
          %s187 = sand.u32 %s27, 1
          %s188 = scalar_lea.sflag [#allocation3], %s187
          %s189 = sand.u32 %s27, 1
          %s190 = smul.addr %s189, 256
          %s191 = scalar_lea.vmem [#allocation2], %s190
          %s193 = ssub.s32 4096, 4096
          %194 = vsyncadd %s188, %s193
          %s195 = smul.addr %s17, 32
          %s196 = smul.addr %s195, 128
          %s197 = scalar_lea.hbm %s0, %s196
          %s198 = sshll.u32 %s191, 4
          %s199 = int_to_ptr.vmem [resolvable:$true] %s198
          %204 = dma.hbm_to_vmem [thread:$0]  %s197, 4096, %s199, %s188, 256, 256, 16
        $region36: #{tpu_custom_call.1} parent=31 // pred_fallthru
          _
      $region32: #{tpu_custom_call.1} parent=5 // pred_fallthru
        _
      %p205 = scmp.le.s32.totalorder 1, %s17
      %p206 = scmp.lt.s32.totalorder %s17, 3
      %p207 = pnand %p205, %p206
      %p208 = pneg %p207
      // Predicated region
      $region37: #{tpu_custom_call.1} parent=5 // pred_check
        _
      $region38: #{tpu_custom_call.1} parent=5 // pred_check_branch
        %210 = sbr.rel (%p207) target = $region40
      $region39: #{tpu_custom_call.1} parent=5 // pred_region
        %s211 = ssub.s32 %s17, 1
        %s212 = sand.u32 %s30, 1
        %s213 = scalar_lea.sflag [#allocation3], %s212
        %s214 = sand.u32 %s30, 1
        %s215 = smul.addr %s214, 256
        %s216 = scalar_lea.vmem [#allocation2], %s215
        // Predicated region
        $region41: #{tpu_custom_call.1} parent=39 // pred_check
          %p217 = pneg %p43
        $region42: #{tpu_custom_call.1} parent=39 // pred_check_branch
          %219 = sbr.rel (%p217) target = $region44
        $region43: #{tpu_custom_call.1} parent=39 // pred_region
          %220 = dma.done %s213, 4096
        $region44: #{tpu_custom_call.1} parent=39 // pred_fallthru
          _
        %s221 = sand.u32 %s30, 1
        %s222 = scalar_lea.sflag [#allocation3], %s221
        %s223 = sand.u32 %s30, 1
        %s224 = smul.addr %s223, 256
        %s225 = scalar_lea.vmem [#allocation2], %s224
        %p226 = pneg %p43
        %p227 = pneg %p40
        %p228 = pneg %p64
        %p229 = pneg %p61
        %p230 = pneg %p85
        %p231 = pneg %p82
        %p232 = pneg %p106
        %p233 = pneg %p103
        %p234 = pneg %p127
        %p235 = pneg %p124
        %p236 = pneg %p153
        %p237 = pneg %p150
        %s238 = sand.u32 %s140, 1
        %s239 = scalar_lea.sflag [#allocation4], %s238
        %s240 = sand.u32 %s140, 1
        %s241 = smul.addr %s240, 256
        %s242 = scalar_lea.vmem [#allocation5], %s241
        %v243 = vld [vmem:[%s216] sm:$0xff]
        %v244 = vld [vmem:[%s216 + $0x8] sm:$0xff]
        %v245 = vld [vmem:[%s216 + $0x10] sm:$0xff]
        %v246 = vld [vmem:[%s216 + $0x18] sm:$0xff]
        %v247 = vld [vmem:[%s216 + $0x20] sm:$0xff]
        %v248 = vld [vmem:[%s216 + $0x28] sm:$0xff]
        %v249 = vld [vmem:[%s216 + $0x30] sm:$0xff]
        %v250 = vld [vmem:[%s216 + $0x38] sm:$0xff]
        %v251 = vld [vmem:[%s216 + $0x40] sm:$0xff]
        %v252 = vld [vmem:[%s216 + $0x48] sm:$0xff]
        %v253 = vld [vmem:[%s216 + $0x50] sm:$0xff]
        %v254 = vld [vmem:[%s216 + $0x58] sm:$0xff]
        %v255 = vld [vmem:[%s216 + $0x60] sm:$0xff]
        %v256 = vld [vmem:[%s216 + $0x68] sm:$0xff]
        %v257 = vld [vmem:[%s216 + $0x70] sm:$0xff]
        %v258 = vld [vmem:[%s216 + $0x78] sm:$0xff]
        %v259 = vld [vmem:[%s216 + $0x80] sm:$0xff]
        %v260 = vld [vmem:[%s216 + $0x88] sm:$0xff]
        %v261 = vld [vmem:[%s216 + $0x90] sm:$0xff]
        %v262 = vld [vmem:[%s216 + $0x98] sm:$0xff]
        %v263 = vld [vmem:[%s216 + $0xa0] sm:$0xff]
        %v264 = vld [vmem:[%s216 + $0xa8] sm:$0xff]
        %v265 = vld [vmem:[%s216 + $0xb0] sm:$0xff]
        %v266 = vld [vmem:[%s216 + $0xb8] sm:$0xff]
        %v267 = vld [vmem:[%s216 + $0xc0] sm:$0xff]
        %v268 = vld [vmem:[%s216 + $0xc8] sm:$0xff]
        %v269 = vld [vmem:[%s216 + $0xd0] sm:$0xff]
        %v270 = vld [vmem:[%s216 + $0xd8] sm:$0xff]
        %v271 = vld [vmem:[%s216 + $0xe0] sm:$0xff]
        %v272 = vld [vmem:[%s216 + $0xe8] sm:$0xff]
        %v273 = vld [vmem:[%s216 + $0xf0] sm:$0xff]
        %v274 = vld [vmem:[%s216 + $0xf8] sm:$0xff]
        %v275 = vadd.f32 %v243, %v244
        %276 = vadd.xlane.f32.xlu0 %v275
        %v277 = vpop.xlane.xlu0 %276
        %v278 = vadd.f32 %v245, %v246
        %279 = vadd.xlane.f32.xlu0 %v278
        %v280 = vpop.xlane.xlu0 %279
        %v281 = vadd.f32 %v247, %v248
        %282 = vadd.xlane.f32.xlu0 %v281
        %v283 = vpop.xlane.xlu0 %282
        %v284 = vadd.f32 %v249, %v250
        %285 = vadd.xlane.f32.xlu0 %v284
        %v286 = vpop.xlane.xlu0 %285
        %v287 = vadd.f32 %v251, %v252
        %288 = vadd.xlane.f32.xlu0 %v287
        %v289 = vpop.xlane.xlu0 %288
        %v290 = vadd.f32 %v253, %v254
        %291 = vadd.xlane.f32.xlu0 %v290
        %v292 = vpop.xlane.xlu0 %291
        %v293 = vadd.f32 %v255, %v256
        %294 = vadd.xlane.f32.xlu0 %v293
        %v295 = vpop.xlane.xlu0 %294
        %v296 = vadd.f32 %v257, %v258
        %297 = vadd.xlane.f32.xlu0 %v296
        %v298 = vpop.xlane.xlu0 %297
        %v299 = vadd.f32 %v259, %v260
        %300 = vadd.xlane.f32.xlu0 %v299
        %v301 = vpop.xlane.xlu0 %300
        %v302 = vadd.f32 %v261, %v262
        %303 = vadd.xlane.f32.xlu0 %v302
        %v304 = vpop.xlane.xlu0 %303
        %v305 = vadd.f32 %v263, %v264
        %306 = vadd.xlane.f32.xlu0 %v305
        %v307 = vpop.xlane.xlu0 %306
        %v308 = vadd.f32 %v265, %v266
        %309 = vadd.xlane.f32.xlu0 %v308
        %v310 = vpop.xlane.xlu0 %309
        %v311 = vadd.f32 %v267, %v268
        %312 = vadd.xlane.f32.xlu0 %v311
        %v313 = vpop.xlane.xlu0 %312
        %v314 = vadd.f32 %v269, %v270
        %315 = vadd.xlane.f32.xlu0 %v314
        %v316 = vpop.xlane.xlu0 %315
        %v317 = vadd.f32 %v271, %v272
        %318 = vadd.xlane.f32.xlu0 %v317
        %v319 = vpop.xlane.xlu0 %318
        %v320 = vadd.f32 %v273, %v274
        %321 = vadd.xlane.f32.xlu0 %v320
        %v322 = vpop.xlane.xlu0 %321
        %v323 = vmax.f32 %v243, %v244
        %324 = vmax.xlane.f32.xlu0 %v323
        %v325 = vpop.xlane.xlu0 %324
        %v326 = vmax.f32 %v245, %v246
        %327 = vmax.xlane.f32.xlu0 %v326
        %v328 = vpop.xlane.xlu0 %327
        %v329 = vmax.f32 %v247, %v248
        %330 = vmax.xlane.f32.xlu0 %v329
        %v331 = vpop.xlane.xlu0 %330
        %v332 = vmax.f32 %v249, %v250
        %333 = vmax.xlane.f32.xlu0 %v332
        %v334 = vpop.xlane.xlu0 %333
        %v335 = vmax.f32 %v251, %v252
        %336 = vmax.xlane.f32.xlu0 %v335
        %v337 = vpop.xlane.xlu0 %336
        %v338 = vmax.f32 %v253, %v254
        %339 = vmax.xlane.f32.xlu0 %v338
        %v340 = vpop.xlane.xlu0 %339
        %v341 = vmax.f32 %v255, %v256
        %342 = vmax.xlane.f32.xlu0 %v341
        %v343 = vpop.xlane.xlu0 %342
        %v344 = vmax.f32 %v257, %v258
        %345 = vmax.xlane.f32.xlu0 %v344
        %v346 = vpop.xlane.xlu0 %345
        %v347 = vmax.f32 %v259, %v260
        %348 = vmax.xlane.f32.xlu0 %v347
        %v349 = vpop.xlane.xlu0 %348
        %v350 = vmax.f32 %v261, %v262
        %351 = vmax.xlane.f32.xlu0 %v350
        %v352 = vpop.xlane.xlu0 %351
        %v353 = vmax.f32 %v263, %v264
        %354 = vmax.xlane.f32.xlu0 %v353
        %v355 = vpop.xlane.xlu0 %354
        %v356 = vmax.f32 %v265, %v266
        %357 = vmax.xlane.f32.xlu0 %v356
        %v358 = vpop.xlane.xlu0 %357
        %v359 = vmax.f32 %v267, %v268
        %360 = vmax.xlane.f32.xlu0 %v359
        %v361 = vpop.xlane.xlu0 %360
        %v362 = vmax.f32 %v269, %v270
        %363 = vmax.xlane.f32.xlu0 %v362
        %v364 = vpop.xlane.xlu0 %363
        %v365 = vmax.f32 %v271, %v272
        %366 = vmax.xlane.f32.xlu0 %v365
        %v367 = vpop.xlane.xlu0 %366
        %v368 = vmax.f32 %v273, %v274
        %369 = vmax.xlane.f32.xlu0 %v368
        %v370 = vpop.xlane.xlu0 %369
        %v371 = vmul.f32 %v277, 0.00390625
        %v372 = vmul.f32 %v280, 0.00390625
        %v373 = vmul.f32 %v283, 0.00390625
        %v374 = vmul.f32 %v286, 0.00390625
        %v375 = vmul.f32 %v289, 0.00390625
        %v376 = vmul.f32 %v292, 0.00390625
        %v377 = vmul.f32 %v295, 0.00390625
        %v378 = vmul.f32 %v298, 0.00390625
        %v379 = vmul.f32 %v301, 0.00390625
        %v380 = vmul.f32 %v304, 0.00390625
        %v381 = vmul.f32 %v307, 0.00390625
        %v382 = vmul.f32 %v310, 0.00390625
        %v383 = vmul.f32 %v313, 0.00390625
        %v384 = vmul.f32 %v316, 0.00390625
        %v385 = vmul.f32 %v319, 0.00390625
        %v386 = vmul.f32 %v322, 0.00390625
        %v387 = vld [vmem:[%s1] sm:$0xff]
        %v388 = vld [vmem:[%s2] sm:$0xff]
        %v389 = vld [vmem:[%s3] sm:$0xff]
        %v390 = vld [vmem:[%s3 + $0x8] sm:$0xff]
        %v391 = vld [vmem:[%s3 + $0x10] sm:$0xff]
        %v392 = vld [vmem:[%s3 + $0x18] sm:$0xff]
        %v393 = vld [vmem:[%s3 + $0x20] sm:$0xff]
        %v394 = vld [vmem:[%s3 + $0x28] sm:$0xff]
        %v395 = vld [vmem:[%s3 + $0x30] sm:$0xff]
        %v396 = vld [vmem:[%s3 + $0x38] sm:$0xff]
        %v397 = vld [vmem:[%s3 + $0x40] sm:$0xff]
        %v398 = vld [vmem:[%s3 + $0x48] sm:$0xff]
        %v399 = vld [vmem:[%s3 + $0x50] sm:$0xff]
        %v400 = vld [vmem:[%s3 + $0x58] sm:$0xff]
        %v401 = vld [vmem:[%s3 + $0x60] sm:$0xff]
        %v402 = vld [vmem:[%s3 + $0x68] sm:$0xff]
        %v403 = vld [vmem:[%s3 + $0x70] sm:$0xff]
        %v404 = vld [vmem:[%s3 + $0x78] sm:$0xff]
        %v405 = vld [vmem:[%s4] sm:$0xff]
        %v406 = vld [vmem:[%s4 + $0x8] sm:$0xff]
        %v407 = vld [vmem:[%s4 + $0x10] sm:$0xff]
        %v408 = vld [vmem:[%s4 + $0x18] sm:$0xff]
        %v409 = vld [vmem:[%s4 + $0x20] sm:$0xff]
        %v410 = vld [vmem:[%s4 + $0x28] sm:$0xff]
        %v411 = vld [vmem:[%s4 + $0x30] sm:$0xff]
        %v412 = vld [vmem:[%s4 + $0x38] sm:$0xff]
        %v413 = vld [vmem:[%s4 + $0x40] sm:$0xff]
        %v414 = vld [vmem:[%s4 + $0x48] sm:$0xff]
        %v415 = vld [vmem:[%s4 + $0x50] sm:$0xff]
        %v416 = vld [vmem:[%s4 + $0x58] sm:$0xff]
        %v417 = vld [vmem:[%s4 + $0x60] sm:$0xff]
        %v418 = vld [vmem:[%s4 + $0x68] sm:$0xff]
        %v419 = vld [vmem:[%s4 + $0x70] sm:$0xff]
        %v420 = vld [vmem:[%s4 + $0x78] sm:$0xff]
        %v421 = vlaneseq
        %v422 = vand.u32 %v421, 127
        %vm423 = vcmp.eq.s32.totalorder %v422, 0
        %v424 = vsel %vm423, %v371, %v325
        %v425 = vsel %vm423, %v372, %v328
        %v426 = vsel %vm423, %v373, %v331
        %v427 = vsel %vm423, %v374, %v334
        %v428 = vsel %vm423, %v375, %v337
        %v429 = vsel %vm423, %v376, %v340
        %v430 = vsel %vm423, %v377, %v343
        %v431 = vsel %vm423, %v378, %v346
        %v432 = vsel %vm423, %v379, %v349
        %v433 = vsel %vm423, %v380, %v352
        %v434 = vsel %vm423, %v381, %v355
        %v435 = vsel %vm423, %v382, %v358
        %v436 = vsel %vm423, %v383, %v361
        %v437 = vsel %vm423, %v384, %v364
        %v438 = vsel %vm423, %v385, %v367
        %v439 = vsel %vm423, %v386, %v370
        %441 = vset.pattern.permute.xlu0 0
        %442 = vperm.xlu0 %441, %v388
        %v443 = vpop.permute.xlu0 %442
        %445 = vmatprep.subr.mxu0 0.0
        %446 = vmatpush1.msra.mxu0 %v439
        %447 = vmatprep.subr.mxu0 0.0
        %448 = vmatpush1.msra.mxu0 %v438
        %449 = vmatprep.subr.mxu0 0.0
        %450 = vmatpush1.msra.mxu0 %v437
        %451 = vmatprep.subr.mxu0 0.0
        %452 = vmatpush1.msra.mxu0 %v436
        %453 = vmatprep.subr.mxu0 0.0
        %454 = vmatpush1.msra.mxu0 %v435
        %455 = vmatprep.subr.mxu0 0.0
        %456 = vmatpush1.msra.mxu0 %v434
        %457 = vmatprep.subr.mxu0 0.0
        %458 = vmatpush1.msra.mxu0 %v433
        %459 = vmatprep.subr.mxu0 0.0
        %460 = vmatpush1.msra.mxu0 %v432
        %461 = vmatprep.subr.mxu0 0.0
        %462 = vmatpush1.msra.mxu0 %v431
        %463 = vmatprep.subr.mxu0 0.0
        %464 = vmatpush1.msra.mxu0 %v430
        %465 = vmatprep.subr.mxu0 0.0
        %466 = vmatpush1.msra.mxu0 %v429
        %467 = vmatprep.subr.mxu0 0.0
        %468 = vmatpush1.msra.mxu0 %v428
        %469 = vmatprep.subr.mxu0 0.0
        %470 = vmatpush1.msra.mxu0 %v427
        %471 = vmatprep.subr.mxu0 0.0
        %472 = vmatpush1.msra.mxu0 %v426
        %473 = vmatprep.subr.mxu0 0.0
        %474 = vmatpush1.msra.mxu0 %v425
        %475 = vmatprep.subr.mxu0 0.0
        %476 = vmatpush1.msra.mxu0 %v424
        %477 = vmatprep.subr.mxu0 0.0
        %478 = vmatpush2.msra.mxu0 0.0
        %479 = vmatprep.subr.mxu0 0.0
        %480 = vmatpush2.msra.mxu0 0.0
        %481 = vmatprep.subr.mxu0 0.0
        %482 = vmatpush2.msra.mxu0 0.0
        %483 = vmatprep.subr.mxu0 0.0
        %484 = vmatpush2.msra.mxu0 0.0
        %485 = vmatprep.subr.mxu0 0.0
        %486 = vmatpush2.msra.mxu0 0.0
        %487 = vmatprep.subr.mxu0 0.0
        %488 = vmatpush2.msra.mxu0 0.0
        %489 = vmatprep.subr.mxu0 0.0
        %490 = vmatpush2.msra.mxu0 0.0
        %491 = vmatprep.subr.mxu0 0.0
        %492 = vmatpush2.msra.mxu0 0.0
        %493 = vmatprep.subr.mxu0 0.0
        %494 = vmatpush2.msra.mxu0 0.0
        %495 = vmatprep.subr.mxu0 0.0
        %496 = vmatpush2.msra.mxu0 0.0
        %497 = vmatprep.subr.mxu0 0.0
        %498 = vmatpush2.msra.mxu0 0.0
        %499 = vmatprep.subr.mxu0 0.0
        %500 = vmatpush2.msra.mxu0 0.0
        %501 = vmatprep.subr.mxu0 0.0
        %502 = vmatpush2.msra.mxu0 0.0
        %503 = vmatprep.subr.mxu0 0.0
        %504 = vmatpush2.msra.mxu0 0.0
        %505 = vmatprep.subr.mxu0 0.0
        %506 = vmatpush2.msra.mxu0 0.0
        %507 = vmatprep.subr.mxu0 0.0
        %508 = vmatpush2.msra.mxu0 0.0
        %509 = vmatprep.mubr.f32.mxu0 0.0
        %510 = vmatmul.mubr.f32.gmra.mxu0 %v387
        %v511 = vpop.f32.mrf.mxu0
        %v512 = vadd.f32 %v443, %v511
        %v513 = vpop.f32.mrf.mxu0
        %514 = vdwg.mxu0
        %v515 = vmax.f32 %v512, 0.0
        %517 = vset.pattern.permute.xlu0 0
        %518 = vperm.xlu0 %517, %v405
        %v519 = vpop.permute.xlu0 %518
        %522 = vset.pattern.permute.xlu0 0
        %523 = vperm.xlu0 %522, %v406
        %v524 = vpop.permute.xlu0 %523
        %527 = vset.pattern.permute.xlu0 0
        %528 = vperm.xlu0 %527, %v407
        %v529 = vpop.permute.xlu0 %528
        %532 = vset.pattern.permute.xlu0 0
        %533 = vperm.xlu0 %532, %v408
        %v534 = vpop.permute.xlu0 %533
        %537 = vset.pattern.permute.xlu0 0
        %538 = vperm.xlu0 %537, %v409
        %v539 = vpop.permute.xlu0 %538
        %542 = vset.pattern.permute.xlu0 0
        %543 = vperm.xlu0 %542, %v410
        %v544 = vpop.permute.xlu0 %543
        %547 = vset.pattern.permute.xlu0 0
        %548 = vperm.xlu0 %547, %v411
        %v549 = vpop.permute.xlu0 %548
        %552 = vset.pattern.permute.xlu0 0
        %553 = vperm.xlu0 %552, %v412
        %v554 = vpop.permute.xlu0 %553
        %557 = vset.pattern.permute.xlu0 0
        %558 = vperm.xlu0 %557, %v413
        %v559 = vpop.permute.xlu0 %558
        %562 = vset.pattern.permute.xlu0 0
        %563 = vperm.xlu0 %562, %v414
        %v564 = vpop.permute.xlu0 %563
        %567 = vset.pattern.permute.xlu0 0
        %568 = vperm.xlu0 %567, %v415
        %v569 = vpop.permute.xlu0 %568
        %572 = vset.pattern.permute.xlu0 0
        %573 = vperm.xlu0 %572, %v416
        %v574 = vpop.permute.xlu0 %573
        %577 = vset.pattern.permute.xlu0 0
        %578 = vperm.xlu0 %577, %v417
        %v579 = vpop.permute.xlu0 %578
        %582 = vset.pattern.permute.xlu0 0
        %583 = vperm.xlu0 %582, %v418
        %v584 = vpop.permute.xlu0 %583
        %587 = vset.pattern.permute.xlu0 0
        %588 = vperm.xlu0 %587, %v419
        %v589 = vpop.permute.xlu0 %588
        %592 = vset.pattern.permute.xlu0 0
        %593 = vperm.xlu0 %592, %v420
        %v594 = vpop.permute.xlu0 %593
        %vm596 = vcmask 64512
        %v598 = vsel %vm596, %v389, 0
        %v601 = vsel %vm596, %v390, 0
        %v604 = vsel %vm596, %v391, 0
        %v607 = vsel %vm596, %v392, 0
        %v610 = vsel %vm596, %v393, 0
        %v613 = vsel %vm596, %v394, 0
        %v616 = vsel %vm596, %v395, 0
        %v619 = vsel %vm596, %v396, 0
        %v622 = vsel %vm596, %v397, 0
        %v625 = vsel %vm596, %v398, 0
        %v628 = vsel %vm596, %v399, 0
        %v631 = vsel %vm596, %v400, 0
        %v634 = vsel %vm596, %v401, 0
        %v637 = vsel %vm596, %v402, 0
        %v640 = vsel %vm596, %v403, 0
        %v643 = vsel %vm596, %v404, 0
        %645 = vmatprep.subr.mxu0 0.0
        %646 = vmatpush1.msra.mxu0 0.0
        %647 = vmatprep.subr.mxu0 0.0
        %648 = vmatpush1.msra.mxu0 0.0
        %649 = vmatprep.subr.mxu0 0.0
        %650 = vmatpush1.msra.mxu0 0.0
        %651 = vmatprep.subr.mxu0 0.0
        %652 = vmatpush1.msra.mxu0 0.0
        %653 = vmatprep.subr.mxu0 0.0
        %654 = vmatpush1.msra.mxu0 0.0
        %655 = vmatprep.subr.mxu0 0.0
        %656 = vmatpush1.msra.mxu0 0.0
        %657 = vmatprep.subr.mxu0 0.0
        %658 = vmatpush1.msra.mxu0 0.0
        %659 = vmatprep.subr.mxu0 0.0
        %660 = vmatpush1.msra.mxu0 0.0
        %661 = vmatprep.subr.mxu0 0.0
        %662 = vmatpush1.msra.mxu0 0.0
        %663 = vmatprep.subr.mxu0 0.0
        %664 = vmatpush1.msra.mxu0 0.0
        %665 = vmatprep.subr.mxu0 0.0
        %666 = vmatpush1.msra.mxu0 0.0
        %667 = vmatprep.subr.mxu0 0.0
        %668 = vmatpush1.msra.mxu0 0.0
        %669 = vmatprep.subr.mxu0 0.0
        %670 = vmatpush1.msra.mxu0 0.0
        %671 = vmatprep.subr.mxu0 0.0
        %672 = vmatpush1.msra.mxu0 0.0
        %673 = vmatprep.subr.mxu0 0.0
        %674 = vmatpush1.msra.mxu0 0.0
        %675 = vmatprep.subr.mxu0 0.0
        %676 = vmatpush1.msra.mxu0 %v515
        %677 = vmatprep.subr.mxu0 0.0
        %678 = vmatpush2.msra.mxu0 0.0
        %679 = vmatprep.subr.mxu0 0.0
        %680 = vmatpush2.msra.mxu0 0.0
        %681 = vmatprep.subr.mxu0 0.0
        %682 = vmatpush2.msra.mxu0 0.0
        %683 = vmatprep.subr.mxu0 0.0
        %684 = vmatpush2.msra.mxu0 0.0
        %685 = vmatprep.subr.mxu0 0.0
        %686 = vmatpush2.msra.mxu0 0.0
        %687 = vmatprep.subr.mxu0 0.0
        %688 = vmatpush2.msra.mxu0 0.0
        %689 = vmatprep.subr.mxu0 0.0
        %690 = vmatpush2.msra.mxu0 0.0
        %691 = vmatprep.subr.mxu0 0.0
        %692 = vmatpush2.msra.mxu0 0.0
        %693 = vmatprep.subr.mxu0 0.0
        %694 = vmatpush2.msra.mxu0 0.0
        %695 = vmatprep.subr.mxu0 0.0
        %696 = vmatpush2.msra.mxu0 0.0
        %697 = vmatprep.subr.mxu0 0.0
        %698 = vmatpush2.msra.mxu0 0.0
        %699 = vmatprep.subr.mxu0 0.0
        %700 = vmatpush2.msra.mxu0 0.0
        %701 = vmatprep.subr.mxu0 0.0
        %702 = vmatpush2.msra.mxu0 0.0
        %703 = vmatprep.subr.mxu0 0.0
        %704 = vmatpush2.msra.mxu0 0.0
        %705 = vmatprep.subr.mxu0 0.0
        %706 = vmatpush2.msra.mxu0 0.0
        %707 = vmatprep.subr.mxu0 0.0
        %708 = vmatpush2.msra.mxu0 0.0
        %709 = vmatprep.mubr.f32.mxu0 0.0
        %710 = vmatmul.mubr.f32.gmra.mxu0 %v598
        %v711 = vpop.f32.mrf.mxu0
        %v712 = vadd.f32 %v519, %v711
        %v713 = vpop.f32.mrf.mxu0
        %714 = vmatprep.mubr.f32.mxu0 0.0
        %715 = vmatmul.mubr.f32.gmra.mxu0 %v601
        %v716 = vpop.f32.mrf.mxu0
        %v717 = vadd.f32 %v524, %v716
        %v718 = vpop.f32.mrf.mxu0
        %719 = vmatprep.mubr.f32.mxu0 0.0
        %720 = vmatmul.mubr.f32.gmra.mxu0 %v604
        %v721 = vpop.f32.mrf.mxu0
        %v722 = vadd.f32 %v529, %v721
        %v723 = vpop.f32.mrf.mxu0
        %724 = vmatprep.mubr.f32.mxu0 0.0
        %725 = vmatmul.mubr.f32.gmra.mxu0 %v607
        %v726 = vpop.f32.mrf.mxu0
        %v727 = vadd.f32 %v534, %v726
        %v728 = vpop.f32.mrf.mxu0
        %729 = vmatprep.mubr.f32.mxu0 0.0
        %730 = vmatmul.mubr.f32.gmra.mxu0 %v610
        %v731 = vpop.f32.mrf.mxu0
        %v732 = vadd.f32 %v539, %v731
        %v733 = vpop.f32.mrf.mxu0
        %734 = vmatprep.mubr.f32.mxu0 0.0
        %735 = vmatmul.mubr.f32.gmra.mxu0 %v613
        %v736 = vpop.f32.mrf.mxu0
        %v737 = vadd.f32 %v544, %v736
        %v738 = vpop.f32.mrf.mxu0
        %739 = vmatprep.mubr.f32.mxu0 0.0
        %740 = vmatmul.mubr.f32.gmra.mxu0 %v616
        %v741 = vpop.f32.mrf.mxu0
        %v742 = vadd.f32 %v549, %v741
        %v743 = vpop.f32.mrf.mxu0
        %744 = vmatprep.mubr.f32.mxu0 0.0
        %745 = vmatmul.mubr.f32.gmra.mxu0 %v619
        %v746 = vpop.f32.mrf.mxu0
        %v747 = vadd.f32 %v554, %v746
        %v748 = vpop.f32.mrf.mxu0
        %749 = vmatprep.mubr.f32.mxu0 0.0
        %750 = vmatmul.mubr.f32.gmra.mxu0 %v622
        %v751 = vpop.f32.mrf.mxu0
        %v752 = vadd.f32 %v559, %v751
        %v753 = vpop.f32.mrf.mxu0
        %754 = vmatprep.mubr.f32.mxu0 0.0
        %755 = vmatmul.mubr.f32.gmra.mxu0 %v625
        %v756 = vpop.f32.mrf.mxu0
        %v757 = vadd.f32 %v564, %v756
        %v758 = vpop.f32.mrf.mxu0
        %759 = vmatprep.mubr.f32.mxu0 0.0
        %760 = vmatmul.mubr.f32.gmra.mxu0 %v628
        %v761 = vpop.f32.mrf.mxu0
        %v762 = vadd.f32 %v569, %v761
        %v763 = vpop.f32.mrf.mxu0
        %764 = vmatprep.mubr.f32.mxu0 0.0
        %765 = vmatmul.mubr.f32.gmra.mxu0 %v631
        %v766 = vpop.f32.mrf.mxu0
        %v767 = vadd.f32 %v574, %v766
        %v768 = vpop.f32.mrf.mxu0
        %769 = vmatprep.mubr.f32.mxu0 0.0
        %770 = vmatmul.mubr.f32.gmra.mxu0 %v634
        %v771 = vpop.f32.mrf.mxu0
        %v772 = vadd.f32 %v579, %v771
        %v773 = vpop.f32.mrf.mxu0
        %774 = vmatprep.mubr.f32.mxu0 0.0
        %775 = vmatmul.mubr.f32.gmra.mxu0 %v637
        %v776 = vpop.f32.mrf.mxu0
        %v777 = vadd.f32 %v584, %v776
        %v778 = vpop.f32.mrf.mxu0
        %779 = vmatprep.mubr.f32.mxu0 0.0
        %780 = vmatmul.mubr.f32.gmra.mxu0 %v640
        %v781 = vpop.f32.mrf.mxu0
        %v782 = vadd.f32 %v589, %v781
        %v783 = vpop.f32.mrf.mxu0
        %784 = vmatprep.mubr.f32.mxu0 0.0
        %785 = vmatmul.mubr.f32.gmra.mxu0 %v643
        %v786 = vpop.f32.mrf.mxu0
        %v787 = vadd.f32 %v594, %v786
        %v788 = vpop.f32.mrf.mxu0
        %789 = vdwg.mxu0
        %vm790 = vcmask 15360
        %v791 = vsel %vm790, %v712, 0.0
        %792 = vadd.xlane.f32.xlu0 %v791
        %v793 = vpop.xlane.xlu0 %792
        %v794 = vsel %vm790, %v717, 0.0
        %795 = vadd.xlane.f32.xlu0 %v794
        %v796 = vpop.xlane.xlu0 %795
        %v797 = vsel %vm790, %v722, 0.0
        %798 = vadd.xlane.f32.xlu0 %v797
        %v799 = vpop.xlane.xlu0 %798
        %v800 = vsel %vm790, %v727, 0.0
        %801 = vadd.xlane.f32.xlu0 %v800
        %v802 = vpop.xlane.xlu0 %801
        %v803 = vsel %vm790, %v732, 0.0
        %804 = vadd.xlane.f32.xlu0 %v803
        %v805 = vpop.xlane.xlu0 %804
        %v806 = vsel %vm790, %v737, 0.0
        %807 = vadd.xlane.f32.xlu0 %v806
        %v808 = vpop.xlane.xlu0 %807
        %v809 = vsel %vm790, %v742, 0.0
        %810 = vadd.xlane.f32.xlu0 %v809
        %v811 = vpop.xlane.xlu0 %810
        %v812 = vsel %vm790, %v747, 0.0
        %813 = vadd.xlane.f32.xlu0 %v812
        %v814 = vpop.xlane.xlu0 %813
        %v815 = vsel %vm790, %v752, 0.0
        %816 = vadd.xlane.f32.xlu0 %v815
        %v817 = vpop.xlane.xlu0 %816
        %v818 = vsel %vm790, %v757, 0.0
        %819 = vadd.xlane.f32.xlu0 %v818
        %v820 = vpop.xlane.xlu0 %819
        %v821 = vsel %vm790, %v762, 0.0
        %822 = vadd.xlane.f32.xlu0 %v821
        %v823 = vpop.xlane.xlu0 %822
        %v824 = vsel %vm790, %v767, 0.0
        %825 = vadd.xlane.f32.xlu0 %v824
        %v826 = vpop.xlane.xlu0 %825
        %v827 = vsel %vm790, %v772, 0.0
        %828 = vadd.xlane.f32.xlu0 %v827
        %v829 = vpop.xlane.xlu0 %828
        %v830 = vsel %vm790, %v777, 0.0
        %831 = vadd.xlane.f32.xlu0 %v830
        %v832 = vpop.xlane.xlu0 %831
        %v833 = vsel %vm790, %v782, 0.0
        %834 = vadd.xlane.f32.xlu0 %v833
        %v835 = vpop.xlane.xlu0 %834
        %v836 = vsel %vm790, %v787, 0.0
        %837 = vadd.xlane.f32.xlu0 %v836
        %v838 = vpop.xlane.xlu0 %837
        %v839 = vxor.u32 %v793, 2147483648
        %v840 = vxor.u32 %v796, 2147483648
        %v841 = vxor.u32 %v799, 2147483648
        %v842 = vxor.u32 %v802, 2147483648
        %v843 = vxor.u32 %v805, 2147483648
        %v844 = vxor.u32 %v808, 2147483648
        %v845 = vxor.u32 %v811, 2147483648
        %v846 = vxor.u32 %v814, 2147483648
        %v847 = vxor.u32 %v817, 2147483648
        %v848 = vxor.u32 %v820, 2147483648
        %v849 = vxor.u32 %v823, 2147483648
        %v850 = vxor.u32 %v826, 2147483648
        %v851 = vxor.u32 %v829, 2147483648
        %v852 = vxor.u32 %v832, 2147483648
        %v853 = vxor.u32 %v835, 2147483648
        %v854 = vxor.u32 %v838, 2147483648
        %v855 = vmul.f32 %v839, 1.442695
        %v856 = vpow.pop %v855
        %v857 = vmul.f32 %v840, 1.442695
        %v858 = vpow.pop %v857
        %v859 = vmul.f32 %v841, 1.442695
        %v860 = vpow.pop %v859
        %v861 = vmul.f32 %v842, 1.442695
        %v862 = vpow.pop %v861
        %v863 = vmul.f32 %v843, 1.442695
        %v864 = vpow.pop %v863
        %v865 = vmul.f32 %v844, 1.442695
        %v866 = vpow.pop %v865
        %v867 = vmul.f32 %v845, 1.442695
        %v868 = vpow.pop %v867
        %v869 = vmul.f32 %v846, 1.442695
        %v870 = vpow.pop %v869
        %v871 = vmul.f32 %v847, 1.442695
        %v872 = vpow.pop %v871
        %v873 = vmul.f32 %v848, 1.442695
        %v874 = vpow.pop %v873
        %v875 = vmul.f32 %v849, 1.442695
        %v876 = vpow.pop %v875
        %v877 = vmul.f32 %v850, 1.442695
        %v878 = vpow.pop %v877
        %v879 = vmul.f32 %v851, 1.442695
        %v880 = vpow.pop %v879
        %v881 = vmul.f32 %v852, 1.442695
        %v882 = vpow.pop %v881
        %v883 = vmul.f32 %v853, 1.442695
        %v884 = vpow.pop %v883
        %v885 = vmul.f32 %v854, 1.442695
        %v886 = vpow.pop %v885
        %v887 = vadd.f32 %v856, 1.0
        %v888 = vadd.f32 %v858, 1.0
        %v889 = vadd.f32 %v860, 1.0
        %v890 = vadd.f32 %v862, 1.0
        %v891 = vadd.f32 %v864, 1.0
        %v892 = vadd.f32 %v866, 1.0
        %v893 = vadd.f32 %v868, 1.0
        %v894 = vadd.f32 %v870, 1.0
        %v895 = vadd.f32 %v872, 1.0
        %v896 = vadd.f32 %v874, 1.0
        %v897 = vadd.f32 %v876, 1.0
        %v898 = vadd.f32 %v878, 1.0
        %v899 = vadd.f32 %v880, 1.0
        %v900 = vadd.f32 %v882, 1.0
        %v901 = vadd.f32 %v884, 1.0
        %v902 = vadd.f32 %v886, 1.0
        %v903 = vrcp.pop %v887
        %v904 = vmul.f32 1.0, %v903
        %v905 = vrcp.pop %v888
        %v906 = vmul.f32 1.0, %v905
        %v907 = vrcp.pop %v889
        %v908 = vmul.f32 1.0, %v907
        %v909 = vrcp.pop %v890
        %v910 = vmul.f32 1.0, %v909
        %v911 = vrcp.pop %v891
        %v912 = vmul.f32 1.0, %v911
        %v913 = vrcp.pop %v892
        %v914 = vmul.f32 1.0, %v913
        %v915 = vrcp.pop %v893
        %v916 = vmul.f32 1.0, %v915
        %v917 = vrcp.pop %v894
        %v918 = vmul.f32 1.0, %v917
        %v919 = vrcp.pop %v895
        %v920 = vmul.f32 1.0, %v919
        %v921 = vrcp.pop %v896
        %v922 = vmul.f32 1.0, %v921
        %v923 = vrcp.pop %v897
        %v924 = vmul.f32 1.0, %v923
        %v925 = vrcp.pop %v898
        %v926 = vmul.f32 1.0, %v925
        %v927 = vrcp.pop %v899
        %v928 = vmul.f32 1.0, %v927
        %v929 = vrcp.pop %v900
        %v930 = vmul.f32 1.0, %v929
        %v931 = vrcp.pop %v901
        %v932 = vmul.f32 1.0, %v931
        %v933 = vrcp.pop %v902
        %v934 = vmul.f32 1.0, %v933
        %v935 = vmul.f32 %v243, %v904
        %v936 = vmul.f32 %v244, %v904
        %v937 = vmul.f32 %v245, %v906
        %v938 = vmul.f32 %v246, %v906
        %v939 = vmul.f32 %v247, %v908
        %v940 = vmul.f32 %v248, %v908
        %v941 = vmul.f32 %v249, %v910
        %v942 = vmul.f32 %v250, %v910
        %v943 = vmul.f32 %v251, %v912
        %v944 = vmul.f32 %v252, %v912
        %v945 = vmul.f32 %v253, %v914
        %v946 = vmul.f32 %v254, %v914
        %v947 = vmul.f32 %v255, %v916
        %v948 = vmul.f32 %v256, %v916
        %v949 = vmul.f32 %v257, %v918
        %v950 = vmul.f32 %v258, %v918
        %v951 = vmul.f32 %v259, %v920
        %v952 = vmul.f32 %v260, %v920
        %v953 = vmul.f32 %v261, %v922
        %v954 = vmul.f32 %v262, %v922
        %v955 = vmul.f32 %v263, %v924
        %v956 = vmul.f32 %v264, %v924
        %v957 = vmul.f32 %v265, %v926
        %v958 = vmul.f32 %v266, %v926
        %v959 = vmul.f32 %v267, %v928
        %v960 = vmul.f32 %v268, %v928
        %v961 = vmul.f32 %v269, %v930
        %v962 = vmul.f32 %v270, %v930
        %v963 = vmul.f32 %v271, %v932
        %v964 = vmul.f32 %v272, %v932
        %v965 = vmul.f32 %v273, %v934
        %v966 = vmul.f32 %v274, %v934
        %967 = vst [vmem:[%s242] sm:$0xff] %v935
        %968 = vst [vmem:[%s242 + $0x8] sm:$0xff] %v936
        %969 = vst [vmem:[%s242 + $0x10] sm:$0xff] %v937
        %970 = vst [vmem:[%s242 + $0x18] sm:$0xff] %v938
        %971 = vst [vmem:[%s242 + $0x20] sm:$0xff] %v939
        %972 = vst [vmem:[%s242 + $0x28] sm:$0xff] %v940
        %973 = vst [vmem:[%s242 + $0x30] sm:$0xff] %v941
        %974 = vst [vmem:[%s242 + $0x38] sm:$0xff] %v942
        %975 = vst [vmem:[%s242 + $0x40] sm:$0xff] %v943
        %976 = vst [vmem:[%s242 + $0x48] sm:$0xff] %v944
        %977 = vst [vmem:[%s242 + $0x50] sm:$0xff] %v945
        %978 = vst [vmem:[%s242 + $0x58] sm:$0xff] %v946
        %979 = vst [vmem:[%s242 + $0x60] sm:$0xff] %v947
        %980 = vst [vmem:[%s242 + $0x68] sm:$0xff] %v948
        %981 = vst [vmem:[%s242 + $0x70] sm:$0xff] %v949
        %982 = vst [vmem:[%s242 + $0x78] sm:$0xff] %v950
        %983 = vst [vmem:[%s242 + $0x80] sm:$0xff] %v951
        %984 = vst [vmem:[%s242 + $0x88] sm:$0xff] %v952
        %985 = vst [vmem:[%s242 + $0x90] sm:$0xff] %v953
        %986 = vst [vmem:[%s242 + $0x98] sm:$0xff] %v954
        %987 = vst [vmem:[%s242 + $0xa0] sm:$0xff] %v955
        %988 = vst [vmem:[%s242 + $0xa8] sm:$0xff] %v956
        %989 = vst [vmem:[%s242 + $0xb0] sm:$0xff] %v957
        %990 = vst [vmem:[%s242 + $0xb8] sm:$0xff] %v958
        %991 = vst [vmem:[%s242 + $0xc0] sm:$0xff] %v959
        %992 = vst [vmem:[%s242 + $0xc8] sm:$0xff] %v960
        %993 = vst [vmem:[%s242 + $0xd0] sm:$0xff] %v961
        %994 = vst [vmem:[%s242 + $0xd8] sm:$0xff] %v962
        %995 = vst [vmem:[%s242 + $0xe0] sm:$0xff] %v963
        %996 = vst [vmem:[%s242 + $0xe8] sm:$0xff] %v964
        %997 = vst [vmem:[%s242 + $0xf0] sm:$0xff] %v965
        %998 = vst [vmem:[%s242 + $0xf8] sm:$0xff] %v966
        %s999 = sand.u32 %s140, 1
        %s1000 = scalar_lea.sflag [#allocation4], %s999
        %s1001 = sand.u32 %s140, 1
        %s1002 = smul.addr %s1001, 256
        %s1003 = scalar_lea.vmem [#allocation5], %s1002
        // Predicated region
        $region45: #{tpu_custom_call.1} parent=39 // pred_check
          %p1004 = pneg %p150
        $region46: #{tpu_custom_call.1} parent=39 // pred_check_branch
          %1006 = sbr.rel (%p1004) target = $region48
        $region47: #{tpu_custom_call.1} parent=39 // pred_region
          %s1008 = ssub.s32 4096, 4096
          %1009 = vsyncadd %s1000, %s1008
          %s1010 = smul.addr %s22, 32
          %s1011 = smul.addr %s1010, 128
          %s1012 = scalar_lea.hbm %s5, %s1011
          %s1013 = sshll.u32 %s1003, 4
          %s1014 = int_to_ptr.vmem [resolvable:$true] %s1013
          %1019 = dma.vmem_to_hbm [thread:$0]  %s1014, 4096, %s1012, %s1000, 256, 256, 16
        $region48: #{tpu_custom_call.1} parent=39 // pred_fallthru
          _
      $region40: #{tpu_custom_call.1} parent=5 // pred_fallthru
        _
      %p1020 = scmp.le.s32.totalorder 2, %s17
      // Predicated region
      $region49: #{tpu_custom_call.1} parent=5 // pred_check
        %p1021 = pneg %p1020
      $region50: #{tpu_custom_call.1} parent=5 // pred_check_branch
        %1023 = sbr.rel (%p1021) target = $region52
      $region51: #{tpu_custom_call.1} parent=5 // pred_region
        %s1024 = ssub.s32 %s17, 2
        // Predicated region
        $region53: #{tpu_custom_call.1} parent=51 // pred_check
          %p1025 = pneg %p156
        $region54: #{tpu_custom_call.1} parent=51 // pred_check_branch
          %1027 = sbr.rel (%p1025) target = $region56
        $region55: #{tpu_custom_call.1} parent=51 // pred_region
          %s1028 = sand.u32 %s141, 1
          %s1029 = scalar_lea.sflag [#allocation4], %s1028
          %s1030 = sand.u32 %s141, 1
          %s1031 = smul.addr %s1030, 256
          %s1032 = scalar_lea.vmem [#allocation5], %s1031
          %1033 = dma.done %s1029, 4096
        $region56: #{tpu_custom_call.1} parent=51 // pred_fallthru
          _
      $region52: #{tpu_custom_call.1} parent=5 // pred_fallthru
        _
    $region6: #{tpu_custom_call.1} parent=1 // loop_footer
      %s21 = sadd.s32 1, %s17
    $region7: #{tpu_custom_call.1} parent=1 // loop_footer_branch
      %16 = sbr.rel target = $region3
    $region8: #{tpu_custom_call.1} parent=1 // loop_exit
      _
    %1034 = vsyncpa [#allocation3], 1
    %s1035 = scalar_lea.sflag [#allocation3], 1
    %1036 = vsyncpa %s1035, 1
    %1037 = vsyncpa [#allocation4], 1
    %s1038 = scalar_lea.sflag [#allocation4], 1
    %1039 = vsyncpa %s1038, 1

</llo_original>
